<compile_context>
chip_gen: v6e
topology: v6e:2x2x1
jax: 0.10.0
libtpu: 0.0.40
codegen_flags: <defaults>
</compile_context>

<pallas_src>
import functools
import math

import jax
import jax.numpy as jnp
from jax import lax
from jax.experimental import pallas as pl
from jax.experimental.pallas import tpu as pltpu


def _round_up(x, m):
    return ((x + m - 1) // m) * m


def _vmem_capacity_bytes():
    try:
        return int(pltpu.get_tpu_info().vmem_capacity_bytes)
    except Exception:
        return 64 * 1024 * 1024  # conservative: v7x per-TensorCore VMEM


def _onehot_kernel(ids_ref, table_ref, o_ref, *, n_int, scale):
    """One grid step: gather `tm` rows via a one-hot MXU matmul.

    ids_ref  : (tm, 1) int32 token ids (pipelined VMEM block).
    table_ref: (n_int, d_embed) bf16 table, whole array resident in VMEM.
    o_ref    : (tm, d_embed) output tile (lane-dense full-tile store).
    """
    ids = jnp.clip(ids_ref[...], 0, n_int - 1)                    # (tm, 1)
    tm = ids.shape[0]
    iota = lax.broadcasted_iota(jnp.int32, (tm, n_int), 1)         # (tm, n_int)
    onehot = (iota == ids).astype(table_ref.dtype)                 # bf16 0/1
    acc = jnp.dot(onehot, table_ref[...], preferred_element_type=jnp.float32)
    o_ref[...] = (acc * scale).astype(o_ref.dtype)


def _rowgather_kernel(idx_ref, table_ref, o_ref, *, tm, n_int, scale):
    """Fallback for large vocab (still VMEM-resident): per-row gather.

    idx_ref  : (m_pad,) int32 ids in SMEM (scalar-prefetched).
    table_ref: (n_int, d_embed) table, whole array resident in VMEM.
    o_ref    : (tm, d_embed) output tile (rows written directly, scaled).
    """
    base = pl.program_id(0) * tm

    def body(t, carry):
        row = jnp.clip(idx_ref[base + t], 0, n_int - 1)
        o_ref[pl.ds(t, 1), :] = (
            table_ref[pl.ds(row, 1), :].astype(jnp.float32) * scale
        ).astype(o_ref.dtype)
        return carry

    # TODO(synk): coalesce into (8, d_embed) stores to relieve the vst slot
    # on v5e if this fallback ever becomes hot.
    lax.fori_loop(0, tm, body, 0)


def embedding_int_pallas(idx, table, *, tm=256, onehot_max_vocab=2048):
    """idx: int array of any shape; table: (n_int, d_embed).

    Returns idx.shape + (d_embed,) in table.dtype == table[idx] * sqrt(d_embed).
    """
    n_int, d_embed = table.shape
    scale = float(math.sqrt(d_embed))
    out_dtype = table.dtype
    itemsize = jnp.dtype(out_dtype).itemsize

    orig_shape = idx.shape
    flat = idx.reshape(-1).astype(jnp.int32)
    m = flat.shape[0]

    # Token tile: multiple of 8, clamped so tiny inputs don't over-pad.
    tm = max(8, min(_round_up(tm, 8), _round_up(m, 8)))
    m_pad = _round_up(m, tm)
    if m_pad != m:
        flat = jnp.pad(flat, (0, m_pad - m))  # pad with id 0; sliced off below
    grid = (m_pad // tm,)

    # ---- VMEM budget (per TensorCore; table replicated on each TC) --------
    vmem_cap = _vmem_capacity_bytes()
    table_bytes = n_int * d_embed * itemsize          # single copy (whole-array VMEM operand)
    out_tile = tm * d_embed * itemsize                # double-buffered output blocks
    ids_tile = tm * 128 * 4                           # (tm,1) int32 block, lane-padded
    tmp_bytes = tm * max(n_int, d_embed) * 4 + tm * d_embed * 4  # onehot + f32 acc temporaries
    need = table_bytes + 2 * out_tile + 2 * ids_tile + tmp_bytes + (4 << 20)
    if need > vmem_cap:
        # TODO(synk): streaming path (pl.ANY table + manual double-buffered row DMAs).
        raise NotImplementedError(
            f"embedding table needs ~{need >> 20} MiB VMEM but only "
            f"{vmem_cap >> 20} MiB is available; streaming path not implemented")
    vmem_limit = int(min(vmem_cap, max(32 << 20, need)))

    cparams = pltpu.CompilerParams(
        dimension_semantics=("parallel",),   # v7x megacore shards the token tiles
        vmem_limit_bytes=vmem_limit,
    )

    if n_int <= onehot_max_vocab:
        # ---- Main path: one-hot MXU gather --------------------------------
        ids2d = flat.reshape(m_pad, 1)
        kernel = functools.partial(_onehot_kernel, n_int=n_int, scale=scale)
        out = pl.pallas_call(
            kernel,
            out_shape=jax.ShapeDtypeStruct((m_pad, d_embed), out_dtype),
            grid=grid,
            in_specs=[
                pl.BlockSpec((tm, 1), lambda i: (i, 0)),                 # ids tile
                pl.BlockSpec(memory_space=pltpu.MemorySpace.VMEM),       # whole table, 1 copy
            ],
            out_specs=pl.BlockSpec((tm, d_embed), lambda i: (i, 0)),
            compiler_params=cparams,
        )(ids2d, table)
    else:
        # ---- Fallback: per-row gather (large vocab, table still resident) --
        kernel = functools.partial(_rowgather_kernel, tm=tm, n_int=n_int, scale=scale)
        out = pl.pallas_call(
            kernel,
            out_shape=jax.ShapeDtypeStruct((m_pad, d_embed), out_dtype),
            grid_spec=pltpu.PrefetchScalarGridSpec(
                num_scalar_prefetch=1,                                   # flat ids -> SMEM
                grid=grid,
                in_specs=[pl.BlockSpec(memory_space=pltpu.MemorySpace.VMEM)],
                out_specs=pl.BlockSpec((tm, d_embed), lambda i, idx_ref: (i, 0)),
            ),
            compiler_params=cparams,
        )(flat, table)

    out = out[:m]
    return out.reshape(*orig_shape, d_embed)


def embedding_int_reference(idx, table):
    d_embed = table.shape[1]
    scale = math.sqrt(d_embed)
    emb = jnp.take(table, idx, axis=0)
    return (emb.astype(jnp.float32) * scale).astype(table.dtype)


if __name__ == "__main__":
    # Small shapes consistent with the module: batch=2, seq=8, vocab=256,
    # d_embed=128 (lane-dense last dim).
    B, S = 2, 8
    n_int, d_embed = 256, 128

    key = jax.random.PRNGKey(0)
    k_tab, k_idx = jax.random.split(key)

    # nn.Embedding default init is N(0, 1); module stores it in bfloat16.
    table = jax.random.normal(k_tab, (n_int, d_embed), jnp.float32).astype(jnp.bfloat16)
    idx = jax.random.randint(k_idx, (B, S), 0, n_int, jnp.int32)

    out = embedding_int_pallas(idx, table)
    jax.block_until_ready(out)

    ref = embedding_int_reference(idx, table)
    assert out.shape == (B, S, d_embed)
    assert out.dtype == jnp.bfloat16
    assert jnp.allclose(out.astype(jnp.float32), ref.astype(jnp.float32),
                        atol=1e-2, rtol=1e-2), "mismatch vs reference"

    print("KERNEL_OK")
</pallas_src>

<mosaic_0001>
module attributes {stable_mosaic.version = 11 : i64} {
  func.func @_onehot_kernel(%arg0: i32, %arg1: memref<16x1xi32, #tpu.memory_space<vmem>>, %arg2: memref<256x128xbf16, #tpu.memory_space<vmem>>, %arg3: memref<16x128xbf16, #tpu.memory_space<vmem>>) attributes {dimension_semantics = [#tpu.dimension_semantics<parallel>], iteration_bounds = array<i64: 1>, scalar_prefetch = 0 : i64, scratch_operands = 0 : i64, tpu.core_type = #tpu.core_type<tc>, window_params = [{transform_indices = @transform_0, window_bounds = array<i64: 16, 1>}, {pipeline_mode = #tpu.pipeline_mode<synchronous>, transform_indices = @transform_1, window_bounds = array<i64: 256, 128>}, {transform_indices = @transform_2, window_bounds = array<i64: 16, 128>}]} {
    %c0 = arith.constant 0 : index
    %c0_0 = arith.constant 0 : index
    %0 = vector.load %arg1[%c0, %c0_0] : memref<16x1xi32, #tpu.memory_space<vmem>>, vector<16x1xi32>
    %c0_i32 = arith.constant 0 : i32
    %c255_i32 = arith.constant 255 : i32
    %1 = vector.broadcast %c0_i32 : i32 to vector<16x1xi32>
    %2 = arith.maxsi %1, %0 : vector<16x1xi32>
    %3 = vector.broadcast %c255_i32 : i32 to vector<16x1xi32>
    %4 = arith.minsi %3, %2 : vector<16x1xi32>
    %5 = tpu.iota {dimensions = array<i32: 1>} : vector<16x256xi32>
    %6 = vector.broadcast %4 : vector<16x1xi32> to vector<16x256xi32>
    %7 = arith.cmpi eq, %5, %6 : vector<16x256xi32>
    %8 = arith.extui %7 : vector<16x256xi1> to vector<16x256xi32>
    %9 = arith.sitofp %8 : vector<16x256xi32> to vector<16x256xf32>
    %10 = arith.truncf %9 : vector<16x256xf32> to vector<16x256xbf16>
    %c0_1 = arith.constant 0 : index
    %c0_2 = arith.constant 0 : index
    %11 = vector.load %arg2[%c0_1, %c0_2] : memref<256x128xbf16, #tpu.memory_space<vmem>>, vector<256x128xbf16>
    %cst = arith.constant dense<0.000000e+00> : vector<16x128xf32>
    %12 = tpu.matmul %10, %11, %cst {dimension_numbers = #tpu.dot_dimension_numbers<[1], [0], [0], [1], [0, 0, 1, 1], [], []>} : vector<16x256xbf16>, vector<256x128xbf16>, vector<16x128xf32> -> vector<16x128xf32>
    %cst_3 = arith.constant 11.3137083 : f32
    %13 = vector.broadcast %cst_3 : f32 to vector<16x128xf32>
    %14 = arith.mulf %12, %13 : vector<16x128xf32>
    %15 = arith.truncf %14 : vector<16x128xf32> to vector<16x128xbf16>
    %c0_4 = arith.constant 0 : index
    %c0_5 = arith.constant 0 : index
    %16 = vector.load %arg3[%c0_4, %c0_5] : memref<16x128xbf16, #tpu.memory_space<vmem>>, vector<16x128xbf16>
    tpu.vector_store %arg3[%c0_4, %c0_5], %15 {strides = array<i32>} : memref<16x128xbf16, #tpu.memory_space<vmem>>, vector<16x128xbf16>,
    return
  }
  func.func @transform_0(%arg0: i32) -> (i32, i32) {
    %c0_i32 = arith.constant 0 : i32
    %c0_i32_0 = arith.constant 0 : i32
    return %arg0, %c0_i32 : i32, i32
  }
  func.func @transform_1(%arg0: i32) -> (i32, i32) {
    %c0_i32 = arith.constant 0 : i32
    %c0_i32_0 = arith.constant 0 : i32
    %c0_i32_1 = arith.constant 0 : i32
    return %c0_i32, %c0_i32_0 : i32, i32
  }
  func.func @transform_2(%arg0: i32) -> (i32, i32) {
    %c0_i32 = arith.constant 0 : i32
    %c0_i32_0 = arith.constant 0 : i32
    return %arg0, %c0_i32 : i32, i32
  }
}

</mosaic_0001>

<llo_original>
// kernel: tpu_custom_call.1
$region0: #{tpu_custom_call.1}
  #allocation0 [shape = 'u32[]', space=smem, size = 0x4, offset = 0x4, fixed_abs, tag = 'smem constant byte address 0x4 - core index']
  #allocation1 [shape = 'u32[144,128]{1,0:T(1,128)}', space=vmem, size = 0x12000, scoped, tag = 'internal scratch']
  %s0 = inlined_call_operand.vmem [shape: s32[16,1], index: 0, kind: input, shape index: {}]
  %s1 = inlined_call_operand.hbm [shape: bf16[256,128], index: 1, kind: input, shape index: {}]
  %s2 = inlined_call_operand.hbm [shape: bf16[16,128], index: 2, kind: output, shape index: {}]
  %s3 = sld [smem:[#allocation0]]
  $region22: #{tpu_custom_call.1} parent=0
    _
  %s5 = ssub.s32 1, %s3
  %s6 = scalar_select 0, %s5, %s3
  $region1: #{tpu_custom_call.1} parent=0
    #allocation2 [shape = 'u8[65536]{0}', space=vmem, size = 0x10000, scoped, tag = 'input window, operand 1, single buffered']
    #allocation3 [shape = 's32[1]{0}', space=sflag, size = 0x4, scoped, tag = 'scoped memory for tpu_custom_call.1']
    #allocation4 [shape = 's32[1]{0}', space=sflag, size = 0x4, scoped, tag = 'scoped memory for tpu_custom_call.1']
    #allocation5 [shape = 'u8[4096]{0}', space=vmem, size = 0x1000, scoped, tag = 'output window, operand 0, single buffered']
    %7 = vsyncpa [#allocation3], 0
    %8 = vsyncpa [#allocation4], 0
    // Predicated region
    $region2: #{tpu_custom_call.1} parent=1 // pred_check
      _
    $region3: #{tpu_custom_call.1} parent=1 // pred_check_branch
      %10 = sbr.rel (0) target = $region5
    $region4: #{tpu_custom_call.1} parent=1 // pred_region
      _
    $region5: #{tpu_custom_call.1} parent=1 // pred_fallthru
      _
    // Predicated region
    $region6: #{tpu_custom_call.1} parent=1 // pred_check
      _
    $region7: #{tpu_custom_call.1} parent=1 // pred_check_branch
      %12 = sbr.rel (0) target = $region9
    $region8: #{tpu_custom_call.1} parent=1 // pred_region
      %s14 = ssub.s32 2048, 2048
      %15 = vsyncadd [#allocation3], %s14
      %s16 = sshll.u32 [#allocation2], 4
      %s17 = int_to_ptr.vmem [resolvable:$true] %s16
      %22 = dma.hbm_to_vmem [thread:$0]  %s1, 2048, %s17, [#allocation3], 64, 64, 4
    $region9: #{tpu_custom_call.1} parent=1 // pred_fallthru
      _
    // Predicated region
    $region10: #{tpu_custom_call.1} parent=1 // pred_check
      _
    $region11: #{tpu_custom_call.1} parent=1 // pred_check_branch
      %24 = sbr.rel (0) target = $region13
    $region12: #{tpu_custom_call.1} parent=1 // pred_region
      %25 = dma.done [#allocation3], 2048
    $region13: #{tpu_custom_call.1} parent=1 // pred_fallthru
      _
    %v27 = vld [vmem:[%s0] sm:$0xff]
    %v28 = vld [vmem:[%s0 + $0x8] sm:$0xff]
    %vm29 = vcmp.gt.s32.totalorder %v27, 0
    %v30 = vsel %vm29, %v27, 0
    %vm31 = vcmp.gt.s32.totalorder %v28, 0
    %v32 = vsel %vm31, %v28, 0
    %vm33 = vcmp.lt.s32.totalorder %v30, 255
    %v34 = vsel %vm33, %v30, 255
    %vm35 = vcmp.lt.s32.totalorder %v32, 255
    %v36 = vsel %vm35, %v32, 255
    %v37 = vlaneseq
    %v38 = vand.u32 %v37, 127
    %v39 = vadd.s32 %v38, 128
    %40 = vset.pattern.permute.xlu0 0
    %41 = vperm.xlu0 %40, %v34
    %v42 = vpop.permute.xlu0 %41
    %43 = vset.pattern.permute.xlu0 0
    %44 = vperm.xlu0 %43, %v36
    %v45 = vpop.permute.xlu0 %44
    %vm46 = vcmp.eq.s32.totalorder %v38, %v42
    %vm47 = vcmp.eq.s32.totalorder %v39, %v42
    %vm48 = vcmp.eq.s32.totalorder %v38, %v45
    %vm49 = vcmp.eq.s32.totalorder %v39, %v45
    %v50 = vsel %vm46, 1, 0
    %v51 = vsel %vm47, 1, 0
    %v52 = vsel %vm48, 1, 0
    %v53 = vsel %vm49, 1, 0
    %v54 = vcvt.s32.f32 %v50
    %v55 = vcvt.s32.f32 %v51
    %v56 = vcvt.s32.f32 %v52
    %v57 = vcvt.s32.f32 %v53
    %v58 = vpack.c.bf16 %v56, %v54
    %v59 = vpack.c.bf16 %v57, %v55
    %v60 = vld [vmem:[#allocation2] sm:$0xf]
    %v61 = vld [vmem:[#allocation2 + $0x4] sm:$0xf]
    %v62 = vld [vmem:[#allocation2 + $0x8] sm:$0xf]
    %v63 = vld [vmem:[#allocation2 + $0xc] sm:$0xf]
    %v64 = vld [vmem:[#allocation2 + $0x10] sm:$0xf]
    %v65 = vld [vmem:[#allocation2 + $0x14] sm:$0xf]
    %v66 = vld [vmem:[#allocation2 + $0x18] sm:$0xf]
    %v67 = vld [vmem:[#allocation2 + $0x1c] sm:$0xf]
    %v68 = vld [vmem:[#allocation2 + $0x20] sm:$0xf]
    %v69 = vld [vmem:[#allocation2 + $0x24] sm:$0xf]
    %v70 = vld [vmem:[#allocation2 + $0x28] sm:$0xf]
    %v71 = vld [vmem:[#allocation2 + $0x2c] sm:$0xf]
    %v72 = vld [vmem:[#allocation2 + $0x30] sm:$0xf]
    %v73 = vld [vmem:[#allocation2 + $0x34] sm:$0xf]
    %v74 = vld [vmem:[#allocation2 + $0x38] sm:$0xf]
    %v75 = vld [vmem:[#allocation2 + $0x3c] sm:$0xf]
    %v76 = vld [vmem:[#allocation2 + $0x40] sm:$0xf]
    %v77 = vld [vmem:[#allocation2 + $0x44] sm:$0xf]
    %v78 = vld [vmem:[#allocation2 + $0x48] sm:$0xf]
    %v79 = vld [vmem:[#allocation2 + $0x4c] sm:$0xf]
    %v80 = vld [vmem:[#allocation2 + $0x50] sm:$0xf]
    %v81 = vld [vmem:[#allocation2 + $0x54] sm:$0xf]
    %v82 = vld [vmem:[#allocation2 + $0x58] sm:$0xf]
    %v83 = vld [vmem:[#allocation2 + $0x5c] sm:$0xf]
    %v84 = vld [vmem:[#allocation2 + $0x60] sm:$0xf]
    %v85 = vld [vmem:[#allocation2 + $0x64] sm:$0xf]
    %v86 = vld [vmem:[#allocation2 + $0x68] sm:$0xf]
    %v87 = vld [vmem:[#allocation2 + $0x6c] sm:$0xf]
    %v88 = vld [vmem:[#allocation2 + $0x70] sm:$0xf]
    %v89 = vld [vmem:[#allocation2 + $0x74] sm:$0xf]
    %v90 = vld [vmem:[#allocation2 + $0x78] sm:$0xf]
    %v91 = vld [vmem:[#allocation2 + $0x7c] sm:$0xf]
    %v124 = vunpack.c.l.b16 %v60
    %v125 = vunpack.c.l.b16 %v61
    %v126 = vunpack.c.l.b16 %v62
    %v127 = vunpack.c.l.b16 %v63
    %v128 = vunpack.c.l.b16 %v64
    %v129 = vunpack.c.l.b16 %v65
    %v130 = vunpack.c.l.b16 %v66
    %v131 = vunpack.c.l.b16 %v67
    %v132 = vunpack.c.l.b16 %v68
    %v133 = vunpack.c.l.b16 %v69
    %v134 = vunpack.c.l.b16 %v70
    %v135 = vunpack.c.l.b16 %v71
    %v136 = vunpack.c.l.b16 %v72
    %v137 = vunpack.c.l.b16 %v73
    %v138 = vunpack.c.l.b16 %v74
    %v139 = vunpack.c.l.b16 %v75
    %v140 = vunpack.c.l.b16 %v76
    %v141 = vunpack.c.l.b16 %v77
    %v142 = vunpack.c.l.b16 %v78
    %v143 = vunpack.c.l.b16 %v79
    %v144 = vunpack.c.l.b16 %v80
    %v145 = vunpack.c.l.b16 %v81
    %v146 = vunpack.c.l.b16 %v82
    %v147 = vunpack.c.l.b16 %v83
    %v148 = vunpack.c.l.b16 %v84
    %v149 = vunpack.c.l.b16 %v85
    %v150 = vunpack.c.l.b16 %v86
    %v151 = vunpack.c.l.b16 %v87
    %v152 = vunpack.c.l.b16 %v88
    %v153 = vunpack.c.l.b16 %v89
    %v154 = vunpack.c.l.b16 %v90
    %v155 = vunpack.c.l.b16 %v91
    %v156 = vpack.c.b16 %v125, %v124
    %v157 = vpack.c.b16 %v127, %v126
    %v158 = vpack.c.b16 %v129, %v128
    %v159 = vpack.c.b16 %v131, %v130
    %v160 = vpack.c.b16 %v133, %v132
    %v161 = vpack.c.b16 %v135, %v134
    %v162 = vpack.c.b16 %v137, %v136
    %v163 = vpack.c.b16 %v139, %v138
    %v164 = vpack.c.b16 %v141, %v140
    %v165 = vpack.c.b16 %v143, %v142
    %v166 = vpack.c.b16 %v145, %v144
    %v167 = vpack.c.b16 %v147, %v146
    %v168 = vpack.c.b16 %v149, %v148
    %v169 = vpack.c.b16 %v151, %v150
    %v170 = vpack.c.b16 %v153, %v152
    %v171 = vpack.c.b16 %v155, %v154
    %188 = vmatprep.subr.bf16.mxu0 0
    %189 = vmatpush1.bf16.msra.mxu0 %v163
    %190 = vmatprep.subr.bf16.mxu0 0
    %191 = vmatpush1.bf16.msra.mxu0 %v162
    %192 = vmatprep.subr.bf16.mxu0 0
    %193 = vmatpush1.bf16.msra.mxu0 %v161
    %194 = vmatprep.subr.bf16.mxu0 0
    %195 = vmatpush1.bf16.msra.mxu0 %v160
    %196 = vmatprep.subr.bf16.mxu0 0
    %197 = vmatpush1.bf16.msra.mxu0 %v159
    %198 = vmatprep.subr.bf16.mxu0 0
    %199 = vmatpush1.bf16.msra.mxu0 %v158
    %200 = vmatprep.subr.bf16.mxu0 0
    %201 = vmatpush1.bf16.msra.mxu0 %v157
    %202 = vmatprep.subr.bf16.mxu0 0
    %203 = vmatpush1.bf16.msra.mxu0 %v156
    %204 = vmatprep.subr.bf16.mxu0 0
    %205 = vmatpush2.bf16.msra.mxu0 %v171
    %206 = vmatprep.subr.bf16.mxu0 0
    %207 = vmatpush2.bf16.msra.mxu0 %v170
    %208 = vmatprep.subr.bf16.mxu0 0
    %209 = vmatpush2.bf16.msra.mxu0 %v169
    %210 = vmatprep.subr.bf16.mxu0 0
    %211 = vmatpush2.bf16.msra.mxu0 %v168
    %212 = vmatprep.subr.bf16.mxu0 0
    %213 = vmatpush2.bf16.msra.mxu0 %v167
    %214 = vmatprep.subr.bf16.mxu0 0
    %215 = vmatpush2.bf16.msra.mxu0 %v166
    %216 = vmatprep.subr.bf16.mxu0 0
    %217 = vmatpush2.bf16.msra.mxu0 %v165
    %218 = vmatprep.subr.bf16.mxu0 0
    %219 = vmatpush2.bf16.msra.mxu0 %v164
    %220 = vmatprep.mubr.bf16.mxu0 %v59
    %221 = vmatmul.mubr.bf16.gmra.mxu0 %v58
    %v222 = vpop.f32.mrf.mxu0
    %v223 = vadd.f32 0.0, %v222
    %v224 = vpop.f32.mrf.mxu0
    %v225 = vpop.f32.mrf.mxu0
    %v226 = vadd.f32 0.0, %v225
    %v227 = vpop.f32.mrf.mxu0
    %228 = vdwg.mxu0
    %v229 = vmul.f32 %v223, 11.313708
    %v230 = vmul.f32 %v226, 11.313708
    %v231 = vpack.c.bf16 %v230, %v229
    %v233 = vunpack.c.l.b16 %v231
    %v234 = vunpack.c.h.b16 %v231
    %v235 = vpack.c.b16 %v233, %v233
    %v236 = vpack.c.b16 %v234, %v234
    %239 = vst [vmem:[#allocation5] sm:$0xf] %v235
    %240 = vst [vmem:[#allocation5 + $0x4] sm:$0xf] %v236
    // Predicated region
    $region14: #{tpu_custom_call.1} parent=1 // pred_check
      _
    $region15: #{tpu_custom_call.1} parent=1 // pred_check_branch
      %242 = sbr.rel (0) target = $region17
    $region16: #{tpu_custom_call.1} parent=1 // pred_region
      %s244 = ssub.s32 128, 128
      %245 = vsyncadd [#allocation4], %s244
      %s246 = sshll.u32 [#allocation5], 4
      %s247 = int_to_ptr.vmem [resolvable:$true] %s246
      %252 = dma.vmem_to_hbm [thread:$0]  %s247, 128, %s2, [#allocation4], 64, 64, 4
    $region17: #{tpu_custom_call.1} parent=1 // pred_fallthru
      _
    // Predicated region
    $region18: #{tpu_custom_call.1} parent=1 // pred_check
      _
    $region19: #{tpu_custom_call.1} parent=1 // pred_check_branch
      %254 = sbr.rel (0) target = $region21
    $region20: #{tpu_custom_call.1} parent=1 // pred_region
      %255 = dma.done [#allocation4], 128
    $region21: #{tpu_custom_call.1} parent=1 // pred_fallthru
      _
    %256 = vsyncpa [#allocation3], 1
    %257 = vsyncpa [#allocation4], 1

</llo_original>
